<compile_context>
chip_gen: v7x
topology: tpu7x:2x2x1
jax: 0.10.0
libtpu: 0.0.40
codegen_flags: <defaults>
</compile_context>

<pallas_src>
import jax
import jax.numpy as jnp
from jax.experimental import pallas as pl
from jax.experimental.pallas import tpu as pltpu

UPPER = 0.9
LOWER = 0.1
LMDA = 0.5
RECON_SCALAR = 0.0005

_SUB, _LANE = 8, 128
_TILE_BYTES = 4 * 2**20      # per-input, per-grid-step tile budget (review: 2-4 MiB)


def _num_tensorcores() -> int:
    """Best-effort TensorCore count of the local chip (1 on v5e/v6e, 2 on v7x).

    Anything we cannot positively confirm degrades to 1 (no core split) — per
    the review, a >1 split on a single-TC chip is pure overhead for this
    memory-bound reduction.
    """
    try:
        if jax.devices()[0].platform != "tpu":
            return 1
        info = pltpu.get_tpu_info()
    except Exception:
        return 1
    for attr in ("num_cores", "core_count", "num_tensorcores", "tensorcores_per_chip"):
        val = getattr(info, attr, None)
        if isinstance(val, int) and val >= 1:
            return val
    return 1


def _rows_per_step(n_rows, n_cols, itemsizes, tile_bytes):
    """Rows of the (B, D) view processed per grid step.

    Picks the largest sublane-aligned row count that (a) keeps each input tile
    under `tile_bytes` and (b) divides B exactly, so no padding / masking is
    ever needed.  Falls back to the full batch in a single block otherwise.
    """
    itemsize_max = max(itemsizes)
    itemsize_min = min(itemsizes)
    align = _SUB * max(1, 4 // itemsize_min)        # 8 rows f32, 16 bf16, 32 int8
    rows = max(1, tile_bytes // max(1, n_cols * itemsize_max))
    if rows >= n_rows:
        return n_rows                               # everything in one step
    rows = max(align, (rows // align) * align)
    while rows > align and n_rows % rows != 0:
        rows -= align
    if n_rows % rows == 0:
        return rows
    return n_rows                                   # rare: no aligned divisor fits


def _capsule_loss_kernel(img_ref, rec_ref, labels_ref, logits_ref, out_ref, acc_ref):
    # COMPILE FIX: read grid coordinates only at the top level of the kernel
    # (never inside a pl.when body); the when-bodies just close over them.
    step = pl.program_id(1)
    last_step = pl.num_programs(1) - 1
    part_is_zero = pl.program_id(0) == 0

    @pl.when(step == 0)
    def _init():
        acc_ref[...] = jnp.zeros_like(acc_ref)

    # Streaming reconstruction-SSE partial.  Inputs arrive in their native
    # dtype; the f32 upcast happens on the VPU.  Only the sublane (row) axis is
    # reduced per step; the single cross-lane reduce is paid once in finalize.
    x = img_ref[...].astype(jnp.float32)
    r = rec_ref[...].astype(jnp.float32)
    d = r - x
    acc_ref[...] += jnp.sum(d * d, axis=0, keepdims=True)

    # NOTE: the output block index is constant along the inner (step) axis, so
    # writing it only on the last step is safe; do not make the out index_map
    # depend on `step`.
    @pl.when(step == last_step)
    def _finalize():
        total = RECON_SCALAR * jnp.sum(acc_ref[...])

        # Margin loss (B x NC ~ tens of elements) is counted exactly once:
        # only the partition-0 core adds it (guard closed over from top level).
        logits = logits_ref[...].astype(jnp.float32)
        labels = labels_ref[...].astype(jnp.float32)
        left = jnp.maximum(UPPER - logits, 0.0)
        right = jnp.maximum(logits - LOWER, 0.0)
        margin = jnp.sum(labels * (left * left)
                         + LMDA * (1.0 - labels) * (right * right))
        total = total + jnp.where(part_is_zero, margin, 0.0)

        # Lane-dense write of this partition's partial sum.
        out_ref[...] = jnp.broadcast_to(total, (1, _SUB, _LANE)).astype(jnp.float32)


def capsule_loss(images, labels, logits, reconstructions, *,
                 tile_bytes=_TILE_BYTES, num_parts=None):
    """images: (B, C, H, W); labels/logits: (B, NC); reconstructions: (B, C*H*W)."""
    B = images.shape[0]
    assert reconstructions.size == images.size, "reconstruction size must match images"
    D = images.size // B

    # Free (layout-preserving) reshapes only -- no jnp.pad, no extra HBM copy.
    img2 = images.reshape(B, D)
    rec2 = reconstructions.reshape(B, D)

    tb = _rows_per_step(B, D, (img2.dtype.itemsize, rec2.dtype.itemsize), tile_bytes)
    n_blocks = B // tb

    if num_parts is None:
        num_parts = _num_tensorcores()
    if num_parts < 1 or n_blocks % num_parts != 0:
        num_parts = 1
    n_inner = n_blocks // num_parts

    if num_parts > 1:
        # Only CORE_PARALLEL actually lands the split on both TensorCores (v7x).
        dim_semantics = (getattr(pltpu, "CORE_PARALLEL", "parallel"),
                         getattr(pltpu, "ARBITRARY", "arbitrary"))
    else:
        dim_semantics = ("arbitrary", "arbitrary")

    # Cover 2 streamed inputs x 2 pipeline buffers x tile, plus resident
    # labels/logits/out/acc and slack, so the tile is never capped by the
    # default scoped-VMEM limit (16 MiB on v5e); cap at v7x's 64 MiB physical.
    tile_bytes_actual = tb * D * (img2.dtype.itemsize + rec2.dtype.itemsize)
    vmem_limit = int(min(max(2 * tile_bytes_actual + 4 * 2**20, 16 * 2**20),
                         64 * 2**20))

    cost = pl.CostEstimate(
        flops=3 * B * D + 8 * labels.size,
        transcendentals=0,
        bytes_accessed=int(img2.size * img2.dtype.itemsize
                           + rec2.size * rec2.dtype.itemsize
                           + labels.size * labels.dtype.itemsize
                           + logits.size * logits.dtype.itemsize
                           + num_parts * _SUB * _LANE * 4),
    )

    # TODO(synk): sweep pipeline_mode=pl.Buffered(3) on the data specs if a
    # trace on v7x shows exposed DMA gaps between inner steps.
    def data_spec():
        return pl.BlockSpec((tb, D), lambda p, i: (p * n_inner + i, 0))

    partials = pl.pallas_call(
        _capsule_loss_kernel,
        out_shape=jax.ShapeDtypeStruct((num_parts, _SUB, _LANE), jnp.float32),
        grid_spec=pltpu.PrefetchScalarGridSpec(
            num_scalar_prefetch=0,
            grid=(num_parts, n_inner),
            in_specs=[
                data_spec(),                                        # image rows
                data_spec(),                                        # recon rows
                pl.BlockSpec(labels.shape, lambda p, i: (0, 0)),    # resident
                pl.BlockSpec(logits.shape, lambda p, i: (0, 0)),    # resident
            ],
            out_specs=pl.BlockSpec((1, _SUB, _LANE), lambda p, i: (p, 0, 0)),
            scratch_shapes=[pltpu.VMEM((1, D), jnp.float32)],
        ),
        compiler_params=pltpu.CompilerParams(
            dimension_semantics=dim_semantics,
            vmem_limit_bytes=vmem_limit),
        cost_estimate=cost,
    )(img2, rec2, labels, logits)

    # One lane-dense partial per partition; add them (margin counted once).
    return jnp.sum(partials[:, 0, 0])


def capsule_loss_ref(images, labels, logits, reconstructions):
    images = images.astype(jnp.float32)
    reconstructions = reconstructions.astype(jnp.float32)
    left = jnp.maximum(UPPER - logits, 0.0) ** 2
    right = jnp.maximum(logits - LOWER, 0.0) ** 2
    margin = jnp.sum(labels * left) + LMDA * jnp.sum((1.0 - labels) * right)
    recon = jnp.sum((reconstructions.reshape(images.shape) - images) ** 2)
    return margin + RECON_SCALAR * recon


if __name__ == "__main__":
    key = jax.random.PRNGKey(0)
    k_img, k_lbl, k_log, k_rec = jax.random.split(key, 4)

    # Case 1: toy shapes consistent with the CapsNet forward
    #   images (B=2, C=1, H=16, W=16), labels/logits (B=2, NC=10),
    #   reconstructions (B=2, 256).  Single grid step.
    B, C, H, W, NC = 2, 1, 16, 16, 10
    images = jax.random.uniform(k_img, (B, C, H, W), dtype=jnp.float32)
    label_ids = jax.random.randint(k_lbl, (B,), 0, NC)
    labels = jax.nn.one_hot(label_ids, NC, dtype=jnp.float32)
    logits = jax.random.uniform(k_log, (B, NC), dtype=jnp.float32)
    reconstructions = jax.random.uniform(k_rec, (B, C * H * W), dtype=jnp.float32)

    loss = jax.block_until_ready(capsule_loss(images, labels, logits, reconstructions))
    ref = capsule_loss_ref(images, labels, logits, reconstructions)
    assert jnp.allclose(loss, ref, rtol=1e-5, atol=1e-5), (loss, ref)

    # Case 2: larger batch in bf16 with a small tile budget so the streaming
    # path (multi-step accumulation + in-kernel upcast) is exercised.
    B2 = 32
    k_img2, k_lbl2, k_log2, k_rec2 = jax.random.split(jax.random.PRNGKey(1), 4)
    images2 = jax.random.uniform(k_img2, (B2, C, H, W)).astype(jnp.bfloat16)
    labels2 = jax.nn.one_hot(jax.random.randint(k_lbl2, (B2,), 0, NC), NC,
                             dtype=jnp.float32)
    logits2 = jax.random.uniform(k_log2, (B2, NC), dtype=jnp.float32)
    recon2 = jax.random.uniform(k_rec2, (B2, C * H * W)).astype(jnp.bfloat16)

    loss2 = jax.block_until_ready(
        capsule_loss(images2, labels2, logits2, recon2,
                     tile_bytes=16 * (C * H * W) * 2))   # 16-row bf16 tiles -> 2 steps
    ref2 = capsule_loss_ref(images2, labels2, logits2, recon2)
    assert jnp.allclose(loss2, ref2, rtol=1e-4, atol=1e-2), (loss2, ref2)

    print("KERNEL_OK")
</pallas_src>

<mosaic_0001>
module attributes {stable_mosaic.version = 11 : i64} {
  func.func @_capsule_loss_kernel(%arg0: i32, %arg1: i32, %arg2: memref<2x256xf32, #tpu.memory_space<vmem>>, %arg3: memref<2x256xf32, #tpu.memory_space<vmem>>, %arg4: memref<2x10xf32, #tpu.memory_space<vmem>>, %arg5: memref<2x10xf32, #tpu.memory_space<vmem>>, %arg6: memref<1x8x128xf32, #tpu.memory_space<vmem>>, %arg7: memref<1x256xf32, #tpu.memory_space<vmem>>) attributes {dimension_semantics = [#tpu.dimension_semantics<arbitrary>, #tpu.dimension_semantics<arbitrary>], iteration_bounds = array<i64: 1, 1>, scalar_prefetch = 0 : i64, scratch_operands = 1 : i64, tpu.core_type = #tpu.core_type<tc>, window_params = [{transform_indices = @transform_0, window_bounds = array<i64: 2, 256>}, {transform_indices = @transform_1, window_bounds = array<i64: 2, 256>}, {pipeline_mode = #tpu.pipeline_mode<synchronous>, transform_indices = @transform_2, window_bounds = array<i64: 2, 10>}, {pipeline_mode = #tpu.pipeline_mode<synchronous>, transform_indices = @transform_3, window_bounds = array<i64: 2, 10>}, {transform_indices = @transform_4, window_bounds = array<i64: 1, 8, 128>}]} {
    %c0_i32 = arith.constant 0 : i32
    %0 = arith.cmpi eq, %arg0, %c0_i32 : i32
    %c0_i32_0 = arith.constant 0 : i32
    %1 = arith.cmpi eq, %arg1, %c0_i32_0 : i32
    %2 = arith.extui %1 : i1 to i32
    %c0_i32_1 = arith.constant 0 : i32
    %3 = arith.cmpi ne, %2, %c0_i32_1 : i32
    scf.if %3 {
      %cst_11 = arith.constant 0.000000e+00 : f32
      %16 = vector.broadcast %cst_11 : f32 to vector<1x256xf32>
      %c0_12 = arith.constant 0 : index
      %c0_13 = arith.constant 0 : index
      %17 = vector.load %arg7[%c0_12, %c0_13] : memref<1x256xf32, #tpu.memory_space<vmem>>, vector<1x256xf32>
      tpu.vector_store %arg7[%c0_12, %c0_13], %16 {strides = array<i32>} : memref<1x256xf32, #tpu.memory_space<vmem>>, vector<1x256xf32>,
    } else {
    }
    %c0 = arith.constant 0 : index
    %c0_2 = arith.constant 0 : index
    %4 = vector.load %arg2[%c0, %c0_2] : memref<2x256xf32, #tpu.memory_space<vmem>>, vector<2x256xf32>
    %c0_3 = arith.constant 0 : index
    %c0_4 = arith.constant 0 : index
    %5 = vector.load %arg3[%c0_3, %c0_4] : memref<2x256xf32, #tpu.memory_space<vmem>>, vector<2x256xf32>
    %6 = arith.subf %5, %4 : vector<2x256xf32>
    %c0_5 = arith.constant 0 : index
    %c0_6 = arith.constant 0 : index
    %7 = vector.load %arg7[%c0_5, %c0_6] : memref<1x256xf32, #tpu.memory_space<vmem>>, vector<1x256xf32>
    %8 = arith.mulf %6, %6 : vector<2x256xf32>
    %cst = arith.constant dense<0.000000e+00> : vector<256xf32>
    %9 = vector.multi_reduction <add>, %8, %cst [0] : vector<2x256xf32> to vector<256xf32>
    %10 = vector.shape_cast %9 : vector<256xf32> to vector<1x256xf32>
    %11 = arith.addf %7, %10 : vector<1x256xf32>
    %c0_7 = arith.constant 0 : index
    %c0_8 = arith.constant 0 : index
    %12 = vector.load %arg7[%c0_7, %c0_8] : memref<1x256xf32, #tpu.memory_space<vmem>>, vector<1x256xf32>
    tpu.vector_store %arg7[%c0_7, %c0_8], %11 {strides = array<i32>} : memref<1x256xf32, #tpu.memory_space<vmem>>, vector<1x256xf32>,
    %c0_i32_9 = arith.constant 0 : i32
    %13 = arith.cmpi eq, %arg1, %c0_i32_9 : i32
    %14 = arith.extui %13 : i1 to i32
    %c0_i32_10 = arith.constant 0 : i32
    %15 = arith.cmpi ne, %14, %c0_i32_10 : i32
    scf.if %15 {
      %c0_11 = arith.constant 0 : index
      %c0_12 = arith.constant 0 : index
      %16 = vector.load %arg7[%c0_11, %c0_12] : memref<1x256xf32, #tpu.memory_space<vmem>>, vector<1x256xf32>
      %17 = vector.shape_cast %16 : vector<1x256xf32> to vector<1x1x256xf32>
      %cst_13 = arith.constant dense<0.000000e+00> : vector<1xf32>
      %18 = vector.multi_reduction <add>, %17, %cst_13 [1, 2] : vector<1x1x256xf32> to vector<1xf32>
      %19 = vector.shape_cast %18 : vector<1xf32> to vector<1x1x1xf32>
      %20 = vector.extract %19[0, 0, 0] : f32 from vector<1x1x1xf32>
      %cst_14 = arith.constant 5.000000e-04 : f32
      %21 = arith.mulf %cst_14, %20 : f32
      %c0_15 = arith.constant 0 : index
      %c0_16 = arith.constant 0 : index
      %22 = vector.load %arg5[%c0_15, %c0_16] : memref<2x10xf32, #tpu.memory_space<vmem>>, vector<2x10xf32>
      %c0_17 = arith.constant 0 : index
      %c0_18 = arith.constant 0 : index
      %23 = vector.load %arg4[%c0_17, %c0_18] : memref<2x10xf32, #tpu.memory_space<vmem>>, vector<2x10xf32>
      %cst_19 = arith.constant 0.899999976 : f32
      %24 = vector.broadcast %cst_19 : f32 to vector<2x10xf32>
      %25 = arith.subf %24, %22 : vector<2x10xf32>
      %cst_20 = arith.constant 0.000000e+00 : f32
      %26 = vector.broadcast %cst_20 : f32 to vector<2x10xf32>
      %27 = arith.maximumf %25, %26 : vector<2x10xf32>
      %cst_21 = arith.constant 1.000000e-01 : f32
      %28 = vector.broadcast %cst_21 : f32 to vector<2x10xf32>
      %29 = arith.subf %22, %28 : vector<2x10xf32>
      %cst_22 = arith.constant 0.000000e+00 : f32
      %30 = vector.broadcast %cst_22 : f32 to vector<2x10xf32>
      %31 = arith.maximumf %29, %30 : vector<2x10xf32>
      %32 = arith.mulf %27, %27 : vector<2x10xf32>
      %33 = arith.mulf %23, %32 : vector<2x10xf32>
      %cst_23 = arith.constant 1.000000e+00 : f32
      %34 = vector.broadcast %cst_23 : f32 to vector<2x10xf32>
      %35 = arith.subf %34, %23 : vector<2x10xf32>
      %cst_24 = arith.constant 5.000000e-01 : f32
      %36 = vector.broadcast %cst_24 : f32 to vector<2x10xf32>
      %37 = arith.mulf %36, %35 : vector<2x10xf32>
      %38 = arith.mulf %31, %31 : vector<2x10xf32>
      %39 = arith.mulf %37, %38 : vector<2x10xf32>
      %40 = arith.addf %33, %39 : vector<2x10xf32>
      %41 = vector.shape_cast %40 : vector<2x10xf32> to vector<1x2x10xf32>
      %cst_25 = arith.constant dense<0.000000e+00> : vector<1xf32>
      %42 = vector.multi_reduction <add>, %41, %cst_25 [1, 2] : vector<1x2x10xf32> to vector<1xf32>
      %43 = vector.shape_cast %42 : vector<1xf32> to vector<1x1x1xf32>
      %44 = vector.extract %43[0, 0, 0] : f32 from vector<1x1x1xf32>
      %cst_26 = arith.constant 0.000000e+00 : f32
      %45 = arith.select %0, %44, %cst_26 : f32
      %46 = arith.addf %21, %45 : f32
      %47 = vector.broadcast %46 : f32 to vector<1x8x128xf32>
      %c0_27 = arith.constant 0 : index
      %c0_28 = arith.constant 0 : index
      %c0_29 = arith.constant 0 : index
      %48 = vector.load %arg6[%c0_27, %c0_28, %c0_29] : memref<1x8x128xf32, #tpu.memory_space<vmem>>, vector<1x8x128xf32>
      tpu.vector_store %arg6[%c0_27, %c0_28, %c0_29], %47 {strides = array<i32>} : memref<1x8x128xf32, #tpu.memory_space<vmem>>, vector<1x8x128xf32>,
    } else {
    }
    return
  }
  func.func @transform_0(%arg0: i32, %arg1: i32) -> (i32, i32) {
    %c1_i32 = arith.constant 1 : i32
    %0 = arith.muli %arg0, %c1_i32 : i32
    %1 = arith.addi %0, %arg1 : i32
    %c0_i32 = arith.constant 0 : i32
    %c0_i32_0 = arith.constant 0 : i32
    return %1, %c0_i32 : i32, i32
  }
  func.func @transform_1(%arg0: i32, %arg1: i32) -> (i32, i32) {
    %c1_i32 = arith.constant 1 : i32
    %0 = arith.muli %arg0, %c1_i32 : i32
    %1 = arith.addi %0, %arg1 : i32
    %c0_i32 = arith.constant 0 : i32
    %c0_i32_0 = arith.constant 0 : i32
    return %1, %c0_i32 : i32, i32
  }
  func.func @transform_2(%arg0: i32, %arg1: i32) -> (i32, i32) {
    %c0_i32 = arith.constant 0 : i32
    %c0_i32_0 = arith.constant 0 : i32
    %c0_i32_1 = arith.constant 0 : i32
    return %c0_i32, %c0_i32_0 : i32, i32
  }
  func.func @transform_3(%arg0: i32, %arg1: i32) -> (i32, i32) {
    %c0_i32 = arith.constant 0 : i32
    %c0_i32_0 = arith.constant 0 : i32
    %c0_i32_1 = arith.constant 0 : i32
    return %c0_i32, %c0_i32_0 : i32, i32
  }
  func.func @transform_4(%arg0: i32, %arg1: i32) -> (i32, i32, i32) {
    %c0_i32 = arith.constant 0 : i32
    %c0_i32_0 = arith.constant 0 : i32
    %c0_i32_1 = arith.constant 0 : i32
    return %arg0, %c0_i32, %c0_i32_0 : i32, i32, i32
  }
}

</mosaic_0001>

<llo_original>
// kernel: tpu_custom_call.1
$region0: #{tpu_custom_call.1}
  #allocation0 [shape = 'u32[]', space=smem, size = 0x4, offset = 0x4, fixed_abs, tag = 'smem constant byte address 0x4 - core index']
  #allocation1 [shape = 'u32[144,128]{1,0:T(1,128)}', space=vmem, size = 0x12000, scoped, tag = 'internal scratch']
  #allocation2 [shape = 'f32[1,256]{1,0:T(1,128)}', space=vmem, size = 0x400, scoped, tag = 'scratch operand']
  %s0 = inlined_call_operand.hbm [shape: f32[2,256], index: 0, kind: input, shape index: {}]
  %s1 = inlined_call_operand.hbm [shape: f32[2,256], index: 1, kind: input, shape index: {}]
  %s2 = inlined_call_operand.vmem [shape: f32[2,10], index: 2, kind: input, shape index: {}]
  %s3 = inlined_call_operand.vmem [shape: f32[2,10], index: 3, kind: input, shape index: {}]
  %s4 = inlined_call_operand.hbm [shape: f32[1,8,128], index: 4, kind: output, shape index: {}]
  %s5 = sld [smem:[#allocation0]]
  $region42: #{tpu_custom_call.1} parent=0
    _
  %s7 = ssub.s32 1, %s5
  %s8 = scalar_select 0, %s7, %s5
  $region1: #{tpu_custom_call.1} parent=0
    #allocation3 [shape = 'u8[2048]{0}', space=vmem, size = 0x800, scoped, tag = 'input window, operand 0, single buffered']
    #allocation4 [shape = 's32[1]{0}', space=sflag, size = 0x4, scoped, tag = 'scoped memory for tpu_custom_call.1']
    #allocation5 [shape = 's32[1]{0}', space=sflag, size = 0x4, scoped, tag = 'scoped memory for tpu_custom_call.1']
    #allocation6 [shape = 'u8[2048]{0}', space=vmem, size = 0x800, scoped, tag = 'input window, operand 1, single buffered']
    #allocation7 [shape = 's32[1]{0}', space=sflag, size = 0x4, scoped, tag = 'scoped memory for tpu_custom_call.1']
    #allocation8 [shape = 'u8[4096]{0}', space=vmem, size = 0x1000, scoped, tag = 'output window, operand 0, single buffered']
    %9 = vsyncpa [#allocation4], 0
    %10 = vsyncpa [#allocation7], 0
    %11 = vsyncpa [#allocation5], 0
    // Predicated region
    $region2: #{tpu_custom_call.1} parent=1 // pred_check
      _
    $region3: #{tpu_custom_call.1} parent=1 // pred_check_branch
      %13 = sbr.rel (0) target = $region5
    $region4: #{tpu_custom_call.1} parent=1 // pred_region
      %s14 = sadd.s32 0, 0
      %s16 = ssub.s32 64, 64
      %17 = vsyncadd [#allocation4], %s16
      %s18 = smul.addr %s14, 2
      %s19 = smul.addr %s18, 32
      %s20 = scalar_lea.hbm %s0, %s19
      %s22 = sshll.u32 [#allocation3], 4
      %s23 = int_to_ptr.vmem [resolvable:$true] %s22
      %25 = dma.hbm_to_vmem [thread:$0]  %s20, 64, %s23, [#allocation4]
    $region5: #{tpu_custom_call.1} parent=1 // pred_fallthru
      _
    // Predicated region
    $region6: #{tpu_custom_call.1} parent=1 // pred_check
      _
    $region7: #{tpu_custom_call.1} parent=1 // pred_check_branch
      %27 = sbr.rel (0) target = $region9
    $region8: #{tpu_custom_call.1} parent=1 // pred_region
      %s28 = sadd.s32 0, 0
      %s30 = ssub.s32 64, 64
      %31 = vsyncadd [#allocation7], %s30
      %s32 = smul.addr %s28, 2
      %s33 = smul.addr %s32, 32
      %s34 = scalar_lea.hbm %s1, %s33
      %s36 = sshll.u32 [#allocation6], 4
      %s37 = int_to_ptr.vmem [resolvable:$true] %s36
      %39 = dma.hbm_to_vmem [thread:$0]  %s34, 64, %s37, [#allocation7]
    $region9: #{tpu_custom_call.1} parent=1 // pred_fallthru
      _
    // Predicated region
    $region10: #{tpu_custom_call.1} parent=1 // pred_check
      _
    $region11: #{tpu_custom_call.1} parent=1 // pred_check_branch
      %41 = sbr.rel (0) target = $region13
    $region12: #{tpu_custom_call.1} parent=1 // pred_region
      _
    $region13: #{tpu_custom_call.1} parent=1 // pred_fallthru
      _
    // Predicated region
    $region14: #{tpu_custom_call.1} parent=1 // pred_check
      _
    $region15: #{tpu_custom_call.1} parent=1 // pred_check_branch
      %43 = sbr.rel (0) target = $region17
    $region16: #{tpu_custom_call.1} parent=1 // pred_region
      _
    $region17: #{tpu_custom_call.1} parent=1 // pred_fallthru
      _
    // Predicated region
    $region18: #{tpu_custom_call.1} parent=1 // pred_check
      _
    $region19: #{tpu_custom_call.1} parent=1 // pred_check_branch
      %45 = sbr.rel (0) target = $region21
    $region20: #{tpu_custom_call.1} parent=1 // pred_region
      %46 = dma.done [#allocation4], 64
    $region21: #{tpu_custom_call.1} parent=1 // pred_fallthru
      _
    // Predicated region
    $region22: #{tpu_custom_call.1} parent=1 // pred_check
      _
    $region23: #{tpu_custom_call.1} parent=1 // pred_check_branch
      %48 = sbr.rel (0) target = $region25
    $region24: #{tpu_custom_call.1} parent=1 // pred_region
      %49 = dma.done [#allocation7], 64
    $region25: #{tpu_custom_call.1} parent=1 // pred_fallthru
      _
    %s50 = sadd.s32 0, 0
    %s51 = sadd.s32 0, 0
    %p52 = scmp.eq.s32.totalorder 0, 0
    %p53 = scmp.eq.s32.totalorder 0, 0
    // Predicated region
    $region26: #{tpu_custom_call.1} parent=1 // pred_check
      %p54 = pneg %p53
    $region27: #{tpu_custom_call.1} parent=1 // pred_check_branch
      %56 = sbr.rel (%p54) target = $region29
    $region28: #{tpu_custom_call.1} parent=1 // pred_region
      %v57 = vlaneseq
      %vm58 = vcmp.ge.s32.totalorder %v57, 0
      %vm59 = vcmp.lt.s32.totalorder %v57, 256
      %vm60 = vmand %vm58, %vm59
      %61 = vst.msk [vmem:[#allocation2] sm:$0x3] %vm60, 0.0
    $region29: #{tpu_custom_call.1} parent=1 // pred_fallthru
      _
    %v62 = vld [vmem:[#allocation3] sm:$0xf]
    %v63 = vld [vmem:[#allocation6] sm:$0xf]
    %v64 = vsub.f32 %v63, %v62
    %v65 = vld [vmem:[#allocation2] sm:$0x3]
    %v66 = vmul.f32 %v64, %v64
    %v69 = vunpack.c.l.s4 1983009808
    %v70 = vunpack.c.0.s8 %v69
    %v71 = vlaneseq
    %v72 = vshrl.u32 %v71, 7
    %v73 = vsub.s32 %v70, %v72
    %v74 = vrot.slane %v66, %v73
    %v75 = vcombine.high %v74, %v74
    %vm78 = vcmask 1041408
    %v79 = vsel %vm78, %v74, 0.0
    %v80 = vrot.slane %v79, 4
    %v81 = vadd.f32 %v79, %v80
    %v82 = vrot.slane %v81, 2
    %v83 = vadd.f32 %v81, %v82
    %v84 = vrot.slane %v83, 1
    %v85 = vadd.f32 %v83, %v84
    %v86 = vsel %vm78, %v75, 0.0
    %v87 = vrot.slane %v86, 4
    %v88 = vadd.f32 %v86, %v87
    %v89 = vrot.slane %v88, 2
    %v90 = vadd.f32 %v88, %v89
    %v91 = vrot.slane %v90, 1
    %v92 = vadd.f32 %v90, %v91
    %v95 = vcombine.low %v85, %v92
    %v97 = vunpack.c.l.s4 1966171168
    %v98 = vunpack.c.0.s8 %v97
    %v99 = vlaneseq
    %v100 = vshrl.u32 %v99, 7
    %v101 = vsub.s32 %v98, %v100
    %v102 = vrot.slane %v95, %v101
    %v104 = vunpack.c.l.s4 1966171168
    %v105 = vunpack.c.0.s8 %v104
    %v106 = vlaneseq
    %v107 = vshrl.u32 %v106, 7
    %v108 = vsub.s32 %v105, %v107
    %v109 = vrot.slane %v102, %v108
    %v111 = vadd.f32 %v65, %v109
    %v112 = vlaneseq
    %vm113 = vcmp.ge.s32.totalorder %v112, 0
    %vm114 = vcmp.lt.s32.totalorder %v112, 256
    %vm115 = vmand %vm113, %vm114
    %116 = vst.msk [vmem:[#allocation2] sm:$0x3] %vm115, %v111
    // Predicated region
    $region30: #{tpu_custom_call.1} parent=1 // pred_check
      %p117 = pneg %p53
    $region31: #{tpu_custom_call.1} parent=1 // pred_check_branch
      %119 = sbr.rel (%p117) target = $region33
    $region32: #{tpu_custom_call.1} parent=1 // pred_region
      %v120 = vld [vmem:[#allocation2] sm:$0x3]
      %v122 = vlaneseq
      %v123 = vshrl.u32 %v122, 7
      %v124 = vsub.s32 0, %v123
      %v125 = vrot.slane %v120, %v124
      %v126 = vlaneseq
      %v127 = vshrl.u32 %v126, 7
      %v128 = vsub.s32 1, %v127
      %v129 = vrot.slane %v120, %v128
      %vm132 = vcmask 1040384
      %v133 = vsel %vm132, %v125, 0.0
      %v134 = vsel %vm132, %v129, 0.0
      %v135 = vadd.f32 %v133, %v134
      %136 = vadd.xlane.f32.xlu0 %v135
      %v137 = vpop.xlane.xlu0 %136
      %v138 = vrot.slane %v137, 4
      %v139 = vadd.f32 %v137, %v138
      %v140 = vrot.slane %v139, 2
      %v141 = vadd.f32 %v139, %v140
      %v142 = vrot.slane %v141, 1
      %v143 = vadd.f32 %v141, %v142
      %s144 = vtos %v143
      %s145 = smul.f32 %s144, 0.0005
      %v146 = vld [vmem:[%s3] sm:$0x3]
      %v147 = vld [vmem:[%s2] sm:$0x3]
      %v148 = vsub.f32 0.9, %v146
      %v149 = vmax.f32 %v148, 0.0
      %v150 = vsub.f32 %v146, 0.1
      %v151 = vmax.f32 %v150, 0.0
      %v152 = vmul.f32 %v149, %v149
      %v153 = vmul.f32 %v147, %v152
      %v154 = vsub.f32 1.0, %v147
      %v155 = vmul.f32 %v154, 0.5
      %v156 = vmul.f32 %v151, %v151
      %v157 = vmul.f32 %v155, %v156
      %v158 = vadd.f32 %v153, %v157
      %vm159 = vcmask 74752
      %v160 = vsel %vm159, %v158, 0.0
      %161 = vadd.xlane.f32.xlu0 %v160
      %v162 = vpop.xlane.xlu0 %161
      %v163 = vrot.slane %v162, 4
      %v164 = vadd.f32 %v162, %v163
      %v165 = vrot.slane %v164, 2
      %v166 = vadd.f32 %v164, %v165
      %v167 = vrot.slane %v166, 1
      %v168 = vadd.f32 %v166, %v167
      %s169 = vtos %v168
      %s170 = scalar_select %p52, %s169, 0.0
      %s171 = sadd.f32 %s145, %s170
      %v172 = vstv %s171
      %173 = vst [vmem:[#allocation8] sm:$0xff] %v172
    $region33: #{tpu_custom_call.1} parent=1 // pred_fallthru
      _
    // Predicated region
    $region34: #{tpu_custom_call.1} parent=1 // pred_check
      _
    $region35: #{tpu_custom_call.1} parent=1 // pred_check_branch
      %175 = sbr.rel (0) target = $region37
    $region36: #{tpu_custom_call.1} parent=1 // pred_region
      %s177 = ssub.s32 128, 128
      %178 = vsyncadd [#allocation5], %s177
      %s180 = sshll.u32 [#allocation8], 4
      %s181 = int_to_ptr.vmem [resolvable:$true] %s180
      %183 = dma.vmem_to_hbm [thread:$0]  %s181, 128, %s4, [#allocation5]
    $region37: #{tpu_custom_call.1} parent=1 // pred_fallthru
      _
    // Predicated region
    $region38: #{tpu_custom_call.1} parent=1 // pred_check
      _
    $region39: #{tpu_custom_call.1} parent=1 // pred_check_branch
      %185 = sbr.rel (0) target = $region41
    $region40: #{tpu_custom_call.1} parent=1 // pred_region
      %186 = dma.done [#allocation5], 128
    $region41: #{tpu_custom_call.1} parent=1 // pred_fallthru
      _
    %187 = vsyncpa [#allocation4], 1
    %188 = vsyncpa [#allocation7], 1
    %189 = vsyncpa [#allocation5], 1

</llo_original>
